<compile_context>
chip_gen: v5e
topology: v5e:2x2
jax: 0.10.0
libtpu: 0.0.40
codegen_flags: <defaults>
</compile_context>

<pallas_src>
import functools

import jax
import jax.numpy as jnp
from jax import lax
from jax.experimental import pallas as pl
from jax.experimental.pallas import tpu as pltpu

_MIB = 1024 * 1024
_LANES = 128

# Per-generation tuning: total modelled per-step VMEM budget (double-buffered
# blocks + f32 intermediates), the scoped-VMEM limit handed to Mosaic, and the
# grid-step constraints (v7x has 2 TensorCores sharing the parallel grid axis).
_GEN_CFG = {
    "v4":      dict(budget=24 * _MIB, vmem_limit=48 * _MIB, min_steps=1, even_steps=False),
    "v5e":     dict(budget=24 * _MIB, vmem_limit=48 * _MIB, min_steps=1, even_steps=False),
    "v5p":     dict(budget=24 * _MIB, vmem_limit=48 * _MIB, min_steps=1, even_steps=False),
    "v6e":     dict(budget=40 * _MIB, vmem_limit=64 * _MIB, min_steps=1, even_steps=False),
    "v7x":     dict(budget=24 * _MIB, vmem_limit=40 * _MIB, min_steps=2, even_steps=True),
    "default": dict(budget=16 * _MIB, vmem_limit=32 * _MIB, min_steps=1, even_steps=False),
}


def _tpu_generation():
    try:
        kind = jax.devices()[0].device_kind.lower()
    except Exception:
        return "default"
    if "v6" in kind:
        return "v6e"
    if "tpu" in kind and "7" in kind:
        return "v7x"
    if "v5 lite" in kind or "v5lite" in kind or "v5e" in kind:
        return "v5e"
    if "v5" in kind:
        return "v5p"
    if "v4" in kind:
        return "v4"
    return "default"


def _round_up(v, m):
    return ((v + m - 1) // m) * m


def _pick_f_tile(n_features, tile_bytes_fn, *, budget_bytes, min_steps, even_steps):
    """Largest divisor f_tile of n_features whose modelled per-step VMEM fits the
    budget, honoring the min / even grid-step constraints when possible."""

    def best(require_even, require_min):
        found = None
        for t in range(1, n_features + 1):
            if n_features % t:
                continue
            steps = n_features // t
            if tile_bytes_fn(t) > budget_bytes:
                continue
            if require_min and n_features >= min_steps and steps < min_steps:
                continue
            if require_even and steps % 2 != 0:
                continue
            found = t
        return found

    for req_even, req_min in ((even_steps, True), (False, True), (False, False)):
        t = best(req_even, req_min)
        if t is not None:
            return t
    return 1  # Nothing fits the modelled budget even at f_tile=1: run anyway.


def _softmax_last(z, *, approx):
    """Numerically-stable softmax over the last axis (f32 in, f32 out)."""
    m = jnp.max(z, axis=-1, keepdims=True)
    e = jnp.exp(z - m)
    d = jnp.sum(e, axis=-1, keepdims=True)
    if approx:
        return e * pl.reciprocal(d, approx=True)  # EUP slot, ~free next to the exp
    return e / d


def _hopfield_kernel(*refs, beta, n_iter, classifier, precompute_a,
                     n_valid_classes, n_padded_classes, approx_softmax, unroll):
    if precompute_a:
        x_ref, p_ref, a_ref, out_ref = refs
    else:
        x_ref, p_ref, out_ref = refs

    x = x_ref[...]                        # (F_TILE, B, N_pad)      mxu dtype
    p = p_ref[...]                        # (F_TILE, C_pad, N_pad)  mxu dtype

    if precompute_a:
        a = a_ref[...]                    # (F_TILE, C_pad, C_pad), beta folded in
    else:
        a = (beta * jnp.einsum('fin,fjn->fij', p, p,
                               preferred_element_type=jnp.float32)).astype(p.dtype)

    # logits[f] = beta * X_f @ P_f^T  -> (F_TILE, B, C_pad), f32 accumulation.
    logits = beta * jnp.einsum('fbn,fcn->fbc', x, p,
                               preferred_element_type=jnp.float32)

    # Classes past n_valid_classes are zero padding (zero pattern rows); mask
    # them to a large negative before every softmax so they carry no mass.
    need_mask = n_valid_classes < n_padded_classes
    if need_mask:
        cls_idx = lax.broadcasted_iota(jnp.int32, (1, 1, n_padded_classes), 2)
        valid = cls_idx < n_valid_classes

    def _masked(z):
        return jnp.where(valid, z, jnp.float32(-1e30)) if need_mask else z

    def _body(_, lg):
        s = _softmax_last(_masked(lg), approx=approx_softmax)
        # A is symmetric, so softmax @ A == softmax @ A^T (canonical batched form,
        # no operand transpose on the MXU path).
        return jnp.einsum('fbk,fkc->fbc', s.astype(a.dtype), a,
                          preferred_element_type=jnp.float32)

    if n_iter > 0:
        logits = lax.fori_loop(0, n_iter, _body, logits, unroll=unroll)

    if classifier:
        out_ref[...] = logits.astype(out_ref.dtype)
    else:
        s = _softmax_last(_masked(logits), approx=False)  # exact final normalization
        out_ref[...] = jnp.einsum('fbc,fcn->fbn', s.astype(p.dtype), p,
                                  preferred_element_type=jnp.float32
                                  ).astype(out_ref.dtype)


def hopfield_layer_forward(x, patterns, *, temperature, n_iter, classifier=True,
                           mxu_dtype=jnp.bfloat16, approx_softmax=True,
                           precompute_a=True, pad_lanes=True, f_tile=None):
    """Pallas TPU implementation of HopfieldLayer.forward.

    Args:
      x:        (B, n_features, n_neurons) array (or reshapeable to it).
      patterns: (n_features, n_classes, n_neurons) array.
    Returns:
      (B, n_features, n_classes) if classifier else (B, n_features, n_neurons).
    """
    assert float(temperature) > 0.0
    n_iter = int(n_iter)
    assert n_iter >= 0
    beta = 1.0 / float(temperature)

    F, C, N = patterns.shape
    B = x.shape[0]
    x = jnp.reshape(x, (B, F, N))
    out_dtype = x.dtype
    mxu_dtype = jnp.dtype(mxu_dtype)

    # Zero-pad classes / neurons to lane (128) multiples: lane-dense MXU operands
    # and output stores (vst instead of vst.msk).  Padded neurons are exact
    # no-ops; padded classes are masked inside the kernel.
    C_pad = _round_up(C, _LANES) if pad_lanes else C
    N_pad = _round_up(N, _LANES) if pad_lanes else N
    out_valid = C if classifier else N
    out_pad = C_pad if classifier else N_pad

    pat = patterns
    if C_pad != C or N_pad != N:
        pat = jnp.pad(pat, ((0, 0), (0, C_pad - C), (0, N_pad - N)))
    if N_pad != N:
        x = jnp.pad(x, ((0, 0), (0, 0), (0, N_pad - N)))

    # Feature-major relayout for the batched MXU contractions.  Kept in the XLA
    # wrapper (Mosaic only transposes the two minor dims in-kernel); the cast to
    # the MXU operand dtype fuses with it and halves kernel HBM bytes.
    x_f = jnp.transpose(x, (1, 0, 2)).astype(mxu_dtype)       # (F, B, N_pad)
    p_f = pat.astype(mxu_dtype)                                # (F, C_pad, N_pad)

    gen = _tpu_generation()
    cfg = _GEN_CFG.get(gen, _GEN_CFG["default"])

    in_isz = mxu_dtype.itemsize
    out_isz = jnp.dtype(out_dtype).itemsize

    def _tile_bytes(t):
        # Double-buffered HBM<->VMEM blocks ...
        blk = t * B * N_pad * in_isz             # x block
        blk += t * C_pad * N_pad * in_isz        # patterns block
        if precompute_a:
            blk += t * C_pad * C_pad * in_isz    # A block
        blk += t * B * out_pad * out_isz         # output block
        total = 2 * blk
        # ... plus the f32 in-kernel intermediates.
        total += 4 * t * B * C_pad * 4           # logits + softmax temporaries
        total += t * B * C_pad * in_isz          # softmax cast for the MXU
        total += t * C_pad * C_pad * 4           # A (in-kernel compute / headroom)
        if not classifier:
            total += t * B * N_pad * 4           # feature-extractor accumulator
        return total

    if f_tile is None:
        f_tile = _pick_f_tile(F, _tile_bytes, budget_bytes=cfg["budget"],
                              min_steps=cfg["min_steps"],
                              even_steps=cfg["even_steps"])
    assert F % f_tile == 0, "f_tile must divide n_features"

    operands = [x_f, p_f]
    in_specs = [
        pl.BlockSpec((f_tile, B, N_pad), lambda f: (f, 0, 0)),
        pl.BlockSpec((f_tile, C_pad, N_pad), lambda f: (f, 0, 0)),
    ]
    if precompute_a:
        # A depends only on the (padded) patterns parameter: compute it once in
        # f32 outside the kernel instead of re-doing F tiny (CxN)x(NxC) matmuls
        # that underfill the 128/256-wide MXU on every call.
        p32 = pat.astype(jnp.float32)
        a_f = (beta * jnp.einsum('fin,fjn->fij', p32, p32,
                                 precision=lax.Precision.HIGHEST)).astype(mxu_dtype)
        operands.append(a_f)
        in_specs.append(pl.BlockSpec((f_tile, C_pad, C_pad), lambda f: (f, 0, 0)))

    kernel = functools.partial(
        _hopfield_kernel, beta=beta, n_iter=n_iter, classifier=bool(classifier),
        precompute_a=bool(precompute_a), n_valid_classes=int(C),
        n_padded_classes=int(C_pad), approx_softmax=bool(approx_softmax),
        unroll=(n_iter <= 4))

    out = pl.pallas_call(
        kernel,
        out_shape=jax.ShapeDtypeStruct((F, B, out_pad), out_dtype),
        grid_spec=pltpu.PrefetchScalarGridSpec(
            num_scalar_prefetch=0,
            grid=(F // f_tile,),
            in_specs=in_specs,
            out_specs=pl.BlockSpec((f_tile, B, out_pad), lambda f: (f, 0, 0)),
        ),
        compiler_params=pltpu.CompilerParams(
            dimension_semantics=("parallel",),
            vmem_limit_bytes=cfg["vmem_limit"]),
    )(*operands)

    out = jnp.transpose(out, (1, 0, 2))            # (B, F, out_pad)
    if out_pad != out_valid:
        out = out[..., :out_valid]
    return out


def _reference_forward(x, patterns, *, temperature, n_iter, classifier=True,
                       operand_dtype=jnp.float32):
    """Pure-JAX reference mirroring the PyTorch forward.  With
    operand_dtype=bfloat16 it additionally mirrors the kernel's bf16-operand /
    f32-accumulation quantization so the comparison tolerance can stay tight."""
    beta = 1.0 / float(temperature)
    F, C, N = patterns.shape
    f32 = jnp.float32
    od = jnp.dtype(operand_dtype)
    hp = lax.Precision.HIGHEST
    p32 = patterns.astype(f32)
    A = (beta * jnp.einsum('fin,fjn->fij', p32, p32, precision=hp)
         ).astype(od).astype(f32)
    xq = jnp.reshape(x, (x.shape[0], F, N)).astype(od).astype(f32)
    pq = patterns.astype(od).astype(f32)
    logits = beta * jnp.einsum('fcn,bfn->bfc', pq, xq, precision=hp)
    for _ in range(int(n_iter)):
        s = jax.nn.softmax(logits, axis=2).astype(od).astype(f32)
        logits = jnp.einsum('fck,bfk->bfc', A, s, precision=hp)
    if classifier:
        return logits
    s = jax.nn.softmax(logits, axis=2).astype(od).astype(f32)
    return jnp.einsum('fcn,bfc->bfn', pq, s, precision=hp)


if __name__ == "__main__":
    # Small, deterministic problem sizes (batch, features, classes, neurons).
    B, F, C, N = 2, 4, 8, 16
    n_iter = 3
    temperature = 1.0

    key = jax.random.PRNGKey(0)
    k_pat, k_x = jax.random.split(key)
    # Parameter init mirrors torch: tanh(randn(n_features, n_classes, n_neurons)).
    patterns = jnp.tanh(jax.random.normal(k_pat, (F, C, N), dtype=jnp.float32))
    x = jax.random.normal(k_x, (B, F, N), dtype=jnp.float32)

    # 1) Precision mode (f32 MXU operands, exact softmax, in-kernel A) vs the
    #    plain f32 reference -- verifies the forward-pass semantics.
    for classifier in (True, False):
        out = jax.block_until_ready(hopfield_layer_forward(
            x, patterns, temperature=temperature, n_iter=n_iter,
            classifier=classifier, mxu_dtype=jnp.float32, approx_softmax=False,
            precompute_a=False))
        ref = _reference_forward(x, patterns, temperature=temperature,
                                 n_iter=n_iter, classifier=classifier)
        assert out.shape == ref.shape
        assert jnp.allclose(out, ref, atol=1e-3, rtol=1e-3), (
            f"precision-mode mismatch vs reference (classifier={classifier})")

    # 2) Precision mode without lane padding (covers the unpadded store path
    #    and the precomputed-A input).
    out = jax.block_until_ready(hopfield_layer_forward(
        x, patterns, temperature=temperature, n_iter=n_iter, classifier=True,
        mxu_dtype=jnp.float32, approx_softmax=False, precompute_a=True,
        pad_lanes=False))
    ref = _reference_forward(x, patterns, temperature=temperature,
                             n_iter=n_iter, classifier=True)
    assert jnp.allclose(out, ref, atol=1e-3, rtol=1e-3), (
        "unpadded-path mismatch vs reference")

    # 3) Default fast mode (bf16 MXU operands / f32 accumulation, approx softmax
    #    reciprocal, precomputed A, lane padding) vs a reference applying the
    #    same bf16 operand quantization.
    for classifier in (True, False):
        out = jax.block_until_ready(hopfield_layer_forward(
            x, patterns, temperature=temperature, n_iter=n_iter,
            classifier=classifier))
        ref = _reference_forward(x, patterns, temperature=temperature,
                                 n_iter=n_iter, classifier=classifier,
                                 operand_dtype=jnp.bfloat16)
        assert out.shape == ref.shape
        assert jnp.allclose(out, ref, atol=2e-2, rtol=2e-2), (
            f"fast-mode mismatch vs bf16 reference (classifier={classifier})")

    print("KERNEL_OK")
</pallas_src>

<mosaic_0001>
module attributes {stable_mosaic.version = 11 : i64} {
  func.func @_hopfield_kernel(%arg0: i32, %arg1: memref<4x2x128xf32, #tpu.memory_space<vmem>>, %arg2: memref<4x128x128xf32, #tpu.memory_space<vmem>>, %arg3: memref<4x2x128xf32, #tpu.memory_space<vmem>>) attributes {dimension_semantics = [#tpu.dimension_semantics<parallel>], iteration_bounds = array<i64: 1>, scalar_prefetch = 0 : i64, scratch_operands = 0 : i64, tpu.core_type = #tpu.core_type<tc>, window_params = [{transform_indices = @transform_0, window_bounds = array<i64: 4, 2, 128>}, {transform_indices = @transform_1, window_bounds = array<i64: 4, 128, 128>}, {transform_indices = @transform_2, window_bounds = array<i64: 4, 2, 128>}]} {
    %c0 = arith.constant 0 : index
    %c0_0 = arith.constant 0 : index
    %c0_1 = arith.constant 0 : index
    %0 = vector.load %arg1[%c0, %c0_0, %c0_1] : memref<4x2x128xf32, #tpu.memory_space<vmem>>, vector<4x2x128xf32>
    %c0_2 = arith.constant 0 : index
    %c0_3 = arith.constant 0 : index
    %c0_4 = arith.constant 0 : index
    %1 = vector.load %arg2[%c0_2, %c0_3, %c0_4] : memref<4x128x128xf32, #tpu.memory_space<vmem>>, vector<4x128x128xf32>
    "tpu.trace_start"() <{level = 10 : i32, message = "fin,fjn->fij"}> : () -> ()
    %cst = arith.constant dense<0.000000e+00> : vector<4x128x128xf32>
    %2 = tpu.matmul %1, %1, %cst {dimension_numbers = #tpu.dot_dimension_numbers<[2], [2], [1], [1], [0, 0, 0, 1, 1, 1], [0], [0]>} : vector<4x128x128xf32>, vector<4x128x128xf32>, vector<4x128x128xf32> -> vector<4x128x128xf32>
    "tpu.trace_stop"() : () -> ()
    %cst_5 = arith.constant 1.000000e+00 : f32
    %3 = vector.broadcast %cst_5 : f32 to vector<4x128x128xf32>
    %4 = arith.mulf %3, %2 : vector<4x128x128xf32>
    "tpu.trace_start"() <{level = 10 : i32, message = "fbn,fcn->fbc"}> : () -> ()
    %cst_6 = arith.constant dense<0.000000e+00> : vector<4x2x128xf32>
    %5 = tpu.matmul %0, %1, %cst_6 {dimension_numbers = #tpu.dot_dimension_numbers<[2], [2], [1], [1], [0, 0, 0, 1, 1, 1], [0], [0]>} : vector<4x2x128xf32>, vector<4x128x128xf32>, vector<4x2x128xf32> -> vector<4x2x128xf32>
    "tpu.trace_stop"() : () -> ()
    %cst_7 = arith.constant 1.000000e+00 : f32
    %6 = vector.broadcast %cst_7 : f32 to vector<4x2x128xf32>
    %7 = arith.mulf %6, %5 : vector<4x2x128xf32>
    %8 = tpu.iota {dimensions = array<i32: 2>} : vector<1x1x128xi32>
    %c8_i32 = arith.constant 8 : i32
    %9 = vector.broadcast %c8_i32 : i32 to vector<1x1x128xi32>
    %10 = arith.cmpi slt, %8, %9 : vector<1x1x128xi32>
    %c0_i32 = arith.constant 0 : i32
    %cst_8 = arith.constant -1.000000e+30 : f32
    %11 = vector.shape_cast %10 : vector<1x1x128xi1> to vector<1x1x128xi1>
    %12 = vector.broadcast %11 : vector<1x1x128xi1> to vector<4x2x128xi1>
    %13 = vector.broadcast %cst_8 : f32 to vector<4x2x128xf32>
    %14 = arith.select %12, %7, %13 : vector<4x2x128xi1>, vector<4x2x128xf32>
    %cst_9 = arith.constant dense<0xFF800000> : vector<4x2xf32>
    %15 = vector.multi_reduction <maximumf>, %14, %cst_9 [2] : vector<4x2x128xf32> to vector<4x2xf32>
    %16 = vector.shape_cast %15 : vector<4x2xf32> to vector<4x2x1xf32>
    %17 = vector.broadcast %16 : vector<4x2x1xf32> to vector<4x2x128xf32>
    %18 = arith.subf %14, %17 : vector<4x2x128xf32>
    %19 = math.exp %18 : vector<4x2x128xf32>
    %cst_10 = arith.constant dense<0.000000e+00> : vector<4x2xf32>
    %20 = vector.multi_reduction <add>, %19, %cst_10 [2] : vector<4x2x128xf32> to vector<4x2xf32>
    %21 = vector.shape_cast %20 : vector<4x2xf32> to vector<4x2x1xf32>
    %22 = vector.broadcast %21 : vector<4x2x1xf32> to vector<4x2x128xf32>
    %23 = arith.divf %19, %22 : vector<4x2x128xf32>
    "tpu.trace_start"() <{level = 10 : i32, message = "fbk,fkc->fbc"}> : () -> ()
    %cst_11 = arith.constant dense<0.000000e+00> : vector<4x2x128xf32>
    %24 = tpu.matmul %23, %4, %cst_11 {dimension_numbers = #tpu.dot_dimension_numbers<[2], [1], [1], [2], [0, 0, 0, 1, 1, 2], [0], [0]>} : vector<4x2x128xf32>, vector<4x128x128xf32>, vector<4x2x128xf32> -> vector<4x2x128xf32>
    "tpu.trace_stop"() : () -> ()
    %c1_i32 = arith.constant 1 : i32
    %cst_12 = arith.constant -1.000000e+30 : f32
    %25 = vector.shape_cast %10 : vector<1x1x128xi1> to vector<1x1x128xi1>
    %26 = vector.broadcast %25 : vector<1x1x128xi1> to vector<4x2x128xi1>
    %27 = vector.broadcast %cst_12 : f32 to vector<4x2x128xf32>
    %28 = arith.select %26, %24, %27 : vector<4x2x128xi1>, vector<4x2x128xf32>
    %cst_13 = arith.constant dense<0xFF800000> : vector<4x2xf32>
    %29 = vector.multi_reduction <maximumf>, %28, %cst_13 [2] : vector<4x2x128xf32> to vector<4x2xf32>
    %30 = vector.shape_cast %29 : vector<4x2xf32> to vector<4x2x1xf32>
    %31 = vector.broadcast %30 : vector<4x2x1xf32> to vector<4x2x128xf32>
    %32 = arith.subf %28, %31 : vector<4x2x128xf32>
    %33 = math.exp %32 : vector<4x2x128xf32>
    %cst_14 = arith.constant dense<0.000000e+00> : vector<4x2xf32>
    %34 = vector.multi_reduction <add>, %33, %cst_14 [2] : vector<4x2x128xf32> to vector<4x2xf32>
    %35 = vector.shape_cast %34 : vector<4x2xf32> to vector<4x2x1xf32>
    %36 = vector.broadcast %35 : vector<4x2x1xf32> to vector<4x2x128xf32>
    %37 = arith.divf %33, %36 : vector<4x2x128xf32>
    "tpu.trace_start"() <{level = 10 : i32, message = "fbk,fkc->fbc"}> : () -> ()
    %cst_15 = arith.constant dense<0.000000e+00> : vector<4x2x128xf32>
    %38 = tpu.matmul %37, %4, %cst_15 {dimension_numbers = #tpu.dot_dimension_numbers<[2], [1], [1], [2], [0, 0, 0, 1, 1, 2], [0], [0]>} : vector<4x2x128xf32>, vector<4x128x128xf32>, vector<4x2x128xf32> -> vector<4x2x128xf32>
    "tpu.trace_stop"() : () -> ()
    %c2_i32 = arith.constant 2 : i32
    %cst_16 = arith.constant -1.000000e+30 : f32
    %39 = vector.shape_cast %10 : vector<1x1x128xi1> to vector<1x1x128xi1>
    %40 = vector.broadcast %39 : vector<1x1x128xi1> to vector<4x2x128xi1>
    %41 = vector.broadcast %cst_16 : f32 to vector<4x2x128xf32>
    %42 = arith.select %40, %38, %41 : vector<4x2x128xi1>, vector<4x2x128xf32>
    %cst_17 = arith.constant dense<0xFF800000> : vector<4x2xf32>
    %43 = vector.multi_reduction <maximumf>, %42, %cst_17 [2] : vector<4x2x128xf32> to vector<4x2xf32>
    %44 = vector.shape_cast %43 : vector<4x2xf32> to vector<4x2x1xf32>
    %45 = vector.broadcast %44 : vector<4x2x1xf32> to vector<4x2x128xf32>
    %46 = arith.subf %42, %45 : vector<4x2x128xf32>
    %47 = math.exp %46 : vector<4x2x128xf32>
    %cst_18 = arith.constant dense<0.000000e+00> : vector<4x2xf32>
    %48 = vector.multi_reduction <add>, %47, %cst_18 [2] : vector<4x2x128xf32> to vector<4x2xf32>
    %49 = vector.shape_cast %48 : vector<4x2xf32> to vector<4x2x1xf32>
    %50 = vector.broadcast %49 : vector<4x2x1xf32> to vector<4x2x128xf32>
    %51 = arith.divf %47, %50 : vector<4x2x128xf32>
    "tpu.trace_start"() <{level = 10 : i32, message = "fbk,fkc->fbc"}> : () -> ()
    %cst_19 = arith.constant dense<0.000000e+00> : vector<4x2x128xf32>
    %52 = tpu.matmul %51, %4, %cst_19 {dimension_numbers = #tpu.dot_dimension_numbers<[2], [1], [1], [2], [0, 0, 0, 1, 1, 2], [0], [0]>} : vector<4x2x128xf32>, vector<4x128x128xf32>, vector<4x2x128xf32> -> vector<4x2x128xf32>
    "tpu.trace_stop"() : () -> ()
    %c0_20 = arith.constant 0 : index
    %c0_21 = arith.constant 0 : index
    %c0_22 = arith.constant 0 : index
    %53 = vector.load %arg3[%c0_20, %c0_21, %c0_22] : memref<4x2x128xf32, #tpu.memory_space<vmem>>, vector<4x2x128xf32>
    tpu.vector_store %arg3[%c0_20, %c0_21, %c0_22], %52 {strides = array<i32>} : memref<4x2x128xf32, #tpu.memory_space<vmem>>, vector<4x2x128xf32>,
    return
  }
  func.func @transform_0(%arg0: i32) -> (i32, i32, i32) {
    %c0_i32 = arith.constant 0 : i32
    %c0_i32_0 = arith.constant 0 : i32
    %c0_i32_1 = arith.constant 0 : i32
    return %arg0, %c0_i32, %c0_i32_0 : i32, i32, i32
  }
  func.func @transform_1(%arg0: i32) -> (i32, i32, i32) {
    %c0_i32 = arith.constant 0 : i32
    %c0_i32_0 = arith.constant 0 : i32
    %c0_i32_1 = arith.constant 0 : i32
    return %arg0, %c0_i32, %c0_i32_0 : i32, i32, i32
  }
  func.func @transform_2(%arg0: i32) -> (i32, i32, i32) {
    %c0_i32 = arith.constant 0 : i32
    %c0_i32_0 = arith.constant 0 : i32
    %c0_i32_1 = arith.constant 0 : i32
    return %arg0, %c0_i32, %c0_i32_0 : i32, i32, i32
  }
}

</mosaic_0001>

<llo_original>
// kernel: tpu_custom_call.1
$region0: #{tpu_custom_call.1}
  #allocation0 [shape = 'u32[]', space=smem, size = 0x4, offset = 0x4, fixed_abs, tag = 'smem constant byte address 0x4 - core index']
  #allocation1 [shape = 'u32[72,128]{1,0:T(1,128)}', space=vmem, size = 0x9000, scoped, tag = 'internal scratch']
  %s0 = inlined_call_operand.hbm [shape: f32[4,2,128], index: 0, kind: input, shape index: {}]
  %s1 = inlined_call_operand.hbm [shape: f32[4,128,128], index: 1, kind: input, shape index: {}]
  %s2 = inlined_call_operand.hbm [shape: f32[4,2,128], index: 2, kind: output, shape index: {}]
  %s3 = sld [smem:[#allocation0]]
  $region26: #{tpu_custom_call.1} parent=0
    _
  %s5 = ssub.s32 1, %s3
  %s6 = scalar_select 0, %s5, %s3
  $region1: #{tpu_custom_call.1} parent=0
    #allocation2 [shape = 'u8[4096]{0}', space=vmem, size = 0x1000, scoped, tag = 'input window, operand 0, single buffered']
    #allocation3 [shape = 's32[1]{0}', space=sflag, size = 0x4, scoped, tag = 'scoped memory for tpu_custom_call.1']
    #allocation4 [shape = 's32[1]{0}', space=sflag, size = 0x4, scoped, tag = 'scoped memory for tpu_custom_call.1']
    #allocation5 [shape = 'u8[262144]{0}', space=vmem, size = 0x40000, scoped, tag = 'input window, operand 1, single buffered']
    #allocation6 [shape = 's32[1]{0}', space=sflag, size = 0x4, scoped, tag = 'scoped memory for tpu_custom_call.1']
    #allocation7 [shape = 'u8[4096]{0}', space=vmem, size = 0x1000, scoped, tag = 'output window, operand 0, single buffered']
    %7 = vsyncpa [#allocation3], 0
    %8 = vsyncpa [#allocation6], 0
    %9 = vsyncpa [#allocation4], 0
    // Predicated region
    $region2: #{tpu_custom_call.1} parent=1 // pred_check
      _
    $region3: #{tpu_custom_call.1} parent=1 // pred_check_branch
      %11 = sbr.rel (0) target = $region5
    $region4: #{tpu_custom_call.1} parent=1 // pred_region
      %13 = vsyncadd [#allocation3], 0
      %s14 = sshll.u32 %s0, 4
      %s15 = int_to_ptr.hbm [resolvable:$true] %s14
      %s16 = sshll.u32 [#allocation2], 4
      %s17 = int_to_ptr.vmem [resolvable:$true] %s16
      %22 = dma.hbm_to_vmem [thread:$0]  %s15, 128, %s17, [#allocation3], 32, 32, 2
    $region5: #{tpu_custom_call.1} parent=1 // pred_fallthru
      _
    // Predicated region
    $region6: #{tpu_custom_call.1} parent=1 // pred_check
      _
    $region7: #{tpu_custom_call.1} parent=1 // pred_check_branch
      %24 = sbr.rel (0) target = $region9
    $region8: #{tpu_custom_call.1} parent=1 // pred_region
      %26 = vsyncadd [#allocation6], 0
      %s27 = sshll.u32 %s1, 4
      %s28 = int_to_ptr.hbm [resolvable:$true] %s27
      %s29 = sshll.u32 [#allocation5], 4
      %s30 = int_to_ptr.vmem [resolvable:$true] %s29
      %35 = dma.hbm_to_vmem [thread:$0]  %s28, 8192, %s30, [#allocation6], 128, 128, 8
    $region9: #{tpu_custom_call.1} parent=1 // pred_fallthru
      _
    // Predicated region
    $region10: #{tpu_custom_call.1} parent=1 // pred_check
      _
    $region11: #{tpu_custom_call.1} parent=1 // pred_check_branch
      %37 = sbr.rel (0) target = $region13
    $region12: #{tpu_custom_call.1} parent=1 // pred_region
      %39 = dma.done [#allocation3], 128
    $region13: #{tpu_custom_call.1} parent=1 // pred_fallthru
      _
    // Predicated region
    $region14: #{tpu_custom_call.1} parent=1 // pred_check
      _
    $region15: #{tpu_custom_call.1} parent=1 // pred_check_branch
      %41 = sbr.rel (0) target = $region17
    $region16: #{tpu_custom_call.1} parent=1 // pred_region
      %43 = dma.done [#allocation6], 8192
    $region17: #{tpu_custom_call.1} parent=1 // pred_fallthru
      _
    %v44 = vld [vmem:[#allocation2] sm:$0x3]
    %v45 = vld [vmem:[#allocation2 + $0x2] sm:$0x3]
    %v46 = vld [vmem:[#allocation2 + $0x4] sm:$0x3]
    %v47 = vld [vmem:[#allocation2 + $0x6] sm:$0x3]
    %v48 = vld [vmem:[#allocation5] sm:$0xff]
    %v49 = vld [vmem:[#allocation5 + $0x8] sm:$0xff]
    %v50 = vld [vmem:[#allocation5 + $0x10] sm:$0xff]
    %v51 = vld [vmem:[#allocation5 + $0x18] sm:$0xff]
    %v52 = vld [vmem:[#allocation5 + $0x20] sm:$0xff]
    %v53 = vld [vmem:[#allocation5 + $0x28] sm:$0xff]
    %v54 = vld [vmem:[#allocation5 + $0x30] sm:$0xff]
    %v55 = vld [vmem:[#allocation5 + $0x38] sm:$0xff]
    %v56 = vld [vmem:[#allocation5 + $0x40] sm:$0xff]
    %v57 = vld [vmem:[#allocation5 + $0x48] sm:$0xff]
    %v58 = vld [vmem:[#allocation5 + $0x50] sm:$0xff]
    %v59 = vld [vmem:[#allocation5 + $0x58] sm:$0xff]
    %v60 = vld [vmem:[#allocation5 + $0x60] sm:$0xff]
    %v61 = vld [vmem:[#allocation5 + $0x68] sm:$0xff]
    %v62 = vld [vmem:[#allocation5 + $0x70] sm:$0xff]
    %v63 = vld [vmem:[#allocation5 + $0x78] sm:$0xff]
    %v64 = vld [vmem:[#allocation5 + $0x80] sm:$0xff]
    %v65 = vld [vmem:[#allocation5 + $0x88] sm:$0xff]
    %v66 = vld [vmem:[#allocation5 + $0x90] sm:$0xff]
    %v67 = vld [vmem:[#allocation5 + $0x98] sm:$0xff]
    %v68 = vld [vmem:[#allocation5 + $0xa0] sm:$0xff]
    %v69 = vld [vmem:[#allocation5 + $0xa8] sm:$0xff]
    %v70 = vld [vmem:[#allocation5 + $0xb0] sm:$0xff]
    %v71 = vld [vmem:[#allocation5 + $0xb8] sm:$0xff]
    %v72 = vld [vmem:[#allocation5 + $0xc0] sm:$0xff]
    %v73 = vld [vmem:[#allocation5 + $0xc8] sm:$0xff]
    %v74 = vld [vmem:[#allocation5 + $0xd0] sm:$0xff]
    %v75 = vld [vmem:[#allocation5 + $0xd8] sm:$0xff]
    %v76 = vld [vmem:[#allocation5 + $0xe0] sm:$0xff]
    %v77 = vld [vmem:[#allocation5 + $0xe8] sm:$0xff]
    %v78 = vld [vmem:[#allocation5 + $0xf0] sm:$0xff]
    %v79 = vld [vmem:[#allocation5 + $0xf8] sm:$0xff]
    %v80 = vld [vmem:[#allocation5 + $0x100] sm:$0xff]
    %v81 = vld [vmem:[#allocation5 + $0x108] sm:$0xff]
    %v82 = vld [vmem:[#allocation5 + $0x110] sm:$0xff]
    %v83 = vld [vmem:[#allocation5 + $0x118] sm:$0xff]
    %v84 = vld [vmem:[#allocation5 + $0x120] sm:$0xff]
    %v85 = vld [vmem:[#allocation5 + $0x128] sm:$0xff]
    %v86 = vld [vmem:[#allocation5 + $0x130] sm:$0xff]
    %v87 = vld [vmem:[#allocation5 + $0x138] sm:$0xff]
    %v88 = vld [vmem:[#allocation5 + $0x140] sm:$0xff]
    %v89 = vld [vmem:[#allocation5 + $0x148] sm:$0xff]
    %v90 = vld [vmem:[#allocation5 + $0x150] sm:$0xff]
    %v91 = vld [vmem:[#allocation5 + $0x158] sm:$0xff]
    %v92 = vld [vmem:[#allocation5 + $0x160] sm:$0xff]
    %v93 = vld [vmem:[#allocation5 + $0x168] sm:$0xff]
    %v94 = vld [vmem:[#allocation5 + $0x170] sm:$0xff]
    %v95 = vld [vmem:[#allocation5 + $0x178] sm:$0xff]
    %v96 = vld [vmem:[#allocation5 + $0x180] sm:$0xff]
    %v97 = vld [vmem:[#allocation5 + $0x188] sm:$0xff]
    %v98 = vld [vmem:[#allocation5 + $0x190] sm:$0xff]
    %v99 = vld [vmem:[#allocation5 + $0x198] sm:$0xff]
    %v100 = vld [vmem:[#allocation5 + $0x1a0] sm:$0xff]
    %v101 = vld [vmem:[#allocation5 + $0x1a8] sm:$0xff]
    %v102 = vld [vmem:[#allocation5 + $0x1b0] sm:$0xff]
    %v103 = vld [vmem:[#allocation5 + $0x1b8] sm:$0xff]
    %v104 = vld [vmem:[#allocation5 + $0x1c0] sm:$0xff]
    %v105 = vld [vmem:[#allocation5 + $0x1c8] sm:$0xff]
    %v106 = vld [vmem:[#allocation5 + $0x1d0] sm:$0xff]
    %v107 = vld [vmem:[#allocation5 + $0x1d8] sm:$0xff]
    %v108 = vld [vmem:[#allocation5 + $0x1e0] sm:$0xff]
    %v109 = vld [vmem:[#allocation5 + $0x1e8] sm:$0xff]
    %v110 = vld [vmem:[#allocation5 + $0x1f0] sm:$0xff]
    %v111 = vld [vmem:[#allocation5 + $0x1f8] sm:$0xff]
    %112 = vmatpush.xpose.msra.mxu0 %v63
    %113 = vmatpush.xpose.msra.mxu0 %v62
    %114 = vmatpush.xpose.msra.mxu0 %v61
    %115 = vmatpush.xpose.msra.mxu0 %v60
    %116 = vmatpush.xpose.msra.mxu0 %v59
    %117 = vmatpush.xpose.msra.mxu0 %v58
    %118 = vmatpush.xpose.msra.mxu0 %v57
    %119 = vmatpush.xpose.msra.mxu0 %v56
    %120 = vmatpush.xpose.msra.mxu0 %v55
    %121 = vmatpush.xpose.msra.mxu0 %v54
    %122 = vmatpush.xpose.msra.mxu0 %v53
    %123 = vmatpush.xpose.msra.mxu0 %v52
    %124 = vmatpush.xpose.msra.mxu0 %v51
    %125 = vmatpush.xpose.msra.mxu0 %v50
    %126 = vmatpush.xpose.msra.mxu0 %v49
    %127 = vmatpush.xpose.msra.mxu0 %v48
    %128 = vmatmul.f32.gmra.mxu0 %v48
    %v129 = vpop.f32.mrf.mxu0
    %v130 = vadd.f32 0.0, %v129
    %131 = vmatmul.f32.gmra.mxu0 %v49
    %v132 = vpop.f32.mrf.mxu0
    %v133 = vadd.f32 0.0, %v132
    %134 = vmatmul.f32.gmra.mxu0 %v50
    %v135 = vpop.f32.mrf.mxu0
    %v136 = vadd.f32 0.0, %v135
    %137 = vmatmul.f32.gmra.mxu0 %v51
    %v138 = vpop.f32.mrf.mxu0
    %v139 = vadd.f32 0.0, %v138
    %140 = vmatmul.f32.gmra.mxu0 %v52
    %v141 = vpop.f32.mrf.mxu0
    %v142 = vadd.f32 0.0, %v141
    %143 = vmatmul.f32.gmra.mxu0 %v53
    %v144 = vpop.f32.mrf.mxu0
    %v145 = vadd.f32 0.0, %v144
    %146 = vmatmul.f32.gmra.mxu0 %v54
    %v147 = vpop.f32.mrf.mxu0
    %v148 = vadd.f32 0.0, %v147
    %149 = vmatmul.f32.gmra.mxu0 %v55
    %v150 = vpop.f32.mrf.mxu0
    %v151 = vadd.f32 0.0, %v150
    %152 = vmatmul.f32.gmra.mxu0 %v56
    %v153 = vpop.f32.mrf.mxu0
    %v154 = vadd.f32 0.0, %v153
    %155 = vmatmul.f32.gmra.mxu0 %v57
    %v156 = vpop.f32.mrf.mxu0
    %v157 = vadd.f32 0.0, %v156
    %158 = vmatmul.f32.gmra.mxu0 %v58
    %v159 = vpop.f32.mrf.mxu0
    %v160 = vadd.f32 0.0, %v159
    %161 = vmatmul.f32.gmra.mxu0 %v59
    %v162 = vpop.f32.mrf.mxu0
    %v163 = vadd.f32 0.0, %v162
    %164 = vmatmul.f32.gmra.mxu0 %v60
    %v165 = vpop.f32.mrf.mxu0
    %v166 = vadd.f32 0.0, %v165
    %167 = vmatmul.f32.gmra.mxu0 %v61
    %v168 = vpop.f32.mrf.mxu0
    %v169 = vadd.f32 0.0, %v168
    %170 = vmatmul.f32.gmra.mxu0 %v62
    %v171 = vpop.f32.mrf.mxu0
    %v172 = vadd.f32 0.0, %v171
    %173 = vmatmul.f32.gmra.mxu0 %v63
    %v174 = vpop.f32.mrf.mxu0
    %v175 = vadd.f32 0.0, %v174
    %176 = vdwg.mxu0
    %177 = vmatpush.xpose.msra.mxu0 %v79
    %178 = vmatpush.xpose.msra.mxu0 %v78
    %179 = vmatpush.xpose.msra.mxu0 %v77
    %180 = vmatpush.xpose.msra.mxu0 %v76
    %181 = vmatpush.xpose.msra.mxu0 %v75
    %182 = vmatpush.xpose.msra.mxu0 %v74
    %183 = vmatpush.xpose.msra.mxu0 %v73
    %184 = vmatpush.xpose.msra.mxu0 %v72
    %185 = vmatpush.xpose.msra.mxu0 %v71
    %186 = vmatpush.xpose.msra.mxu0 %v70
    %187 = vmatpush.xpose.msra.mxu0 %v69
    %188 = vmatpush.xpose.msra.mxu0 %v68
    %189 = vmatpush.xpose.msra.mxu0 %v67
    %190 = vmatpush.xpose.msra.mxu0 %v66
    %191 = vmatpush.xpose.msra.mxu0 %v65
    %192 = vmatpush.xpose.msra.mxu0 %v64
    %193 = vmatmul.f32.gmra.mxu0 %v64
    %v194 = vpop.f32.mrf.mxu0
    %v195 = vadd.f32 0.0, %v194
    %196 = vmatmul.f32.gmra.mxu0 %v65
    %v197 = vpop.f32.mrf.mxu0
    %v198 = vadd.f32 0.0, %v197
    %199 = vmatmul.f32.gmra.mxu0 %v66
    %v200 = vpop.f32.mrf.mxu0
    %v201 = vadd.f32 0.0, %v200
    %202 = vmatmul.f32.gmra.mxu0 %v67
    %v203 = vpop.f32.mrf.mxu0
    %v204 = vadd.f32 0.0, %v203
    %205 = vmatmul.f32.gmra.mxu0 %v68
    %v206 = vpop.f32.mrf.mxu0
    %v207 = vadd.f32 0.0, %v206
    %208 = vmatmul.f32.gmra.mxu0 %v69
    %v209 = vpop.f32.mrf.mxu0
    %v210 = vadd.f32 0.0, %v209
    %211 = vmatmul.f32.gmra.mxu0 %v70
    %v212 = vpop.f32.mrf.mxu0
    %v213 = vadd.f32 0.0, %v212
    %214 = vmatmul.f32.gmra.mxu0 %v71
    %v215 = vpop.f32.mrf.mxu0
    %v216 = vadd.f32 0.0, %v215
    %217 = vmatmul.f32.gmra.mxu0 %v72
    %v218 = vpop.f32.mrf.mxu0
    %v219 = vadd.f32 0.0, %v218
    %220 = vmatmul.f32.gmra.mxu0 %v73
    %v221 = vpop.f32.mrf.mxu0
    %v222 = vadd.f32 0.0, %v221
    %223 = vmatmul.f32.gmra.mxu0 %v74
    %v224 = vpop.f32.mrf.mxu0
    %v225 = vadd.f32 0.0, %v224
    %226 = vmatmul.f32.gmra.mxu0 %v75
    %v227 = vpop.f32.mrf.mxu0
    %v228 = vadd.f32 0.0, %v227
    %229 = vmatmul.f32.gmra.mxu0 %v76
    %v230 = vpop.f32.mrf.mxu0
    %v231 = vadd.f32 0.0, %v230
    %232 = vmatmul.f32.gmra.mxu0 %v77
    %v233 = vpop.f32.mrf.mxu0
    %v234 = vadd.f32 0.0, %v233
    %235 = vmatmul.f32.gmra.mxu0 %v78
    %v236 = vpop.f32.mrf.mxu0
    %v237 = vadd.f32 0.0, %v236
    %238 = vmatmul.f32.gmra.mxu0 %v79
    %v239 = vpop.f32.mrf.mxu0
    %v240 = vadd.f32 0.0, %v239
    %241 = vdwg.mxu0
    %242 = vmatpush.xpose.msra.mxu0 %v95
    %243 = vmatpush.xpose.msra.mxu0 %v94
    %244 = vmatpush.xpose.msra.mxu0 %v93
    %245 = vmatpush.xpose.msra.mxu0 %v92
    %246 = vmatpush.xpose.msra.mxu0 %v91
    %247 = vmatpush.xpose.msra.mxu0 %v90
    %248 = vmatpush.xpose.msra.mxu0 %v89
    %249 = vmatpush.xpose.msra.mxu0 %v88
    %250 = vmatpush.xpose.msra.mxu0 %v87
    %251 = vmatpush.xpose.msra.mxu0 %v86
    %252 = vmatpush.xpose.msra.mxu0 %v85
    %253 = vmatpush.xpose.msra.mxu0 %v84
    %254 = vmatpush.xpose.msra.mxu0 %v83
    %255 = vmatpush.xpose.msra.mxu0 %v82
    %256 = vmatpush.xpose.msra.mxu0 %v81
    %257 = vmatpush.xpose.msra.mxu0 %v80
    %258 = vmatmul.f32.gmra.mxu0 %v80
    %v259 = vpop.f32.mrf.mxu0
    %v260 = vadd.f32 0.0, %v259
    %261 = vmatmul.f32.gmra.mxu0 %v81
    %v262 = vpop.f32.mrf.mxu0
    %v263 = vadd.f32 0.0, %v262
    %264 = vmatmul.f32.gmra.mxu0 %v82
    %v265 = vpop.f32.mrf.mxu0
    %v266 = vadd.f32 0.0, %v265
    %267 = vmatmul.f32.gmra.mxu0 %v83
    %v268 = vpop.f32.mrf.mxu0
    %v269 = vadd.f32 0.0, %v268
    %270 = vmatmul.f32.gmra.mxu0 %v84
    %v271 = vpop.f32.mrf.mxu0
    %v272 = vadd.f32 0.0, %v271
    %273 = vmatmul.f32.gmra.mxu0 %v85
    %v274 = vpop.f32.mrf.mxu0
    %v275 = vadd.f32 0.0, %v274
    %276 = vmatmul.f32.gmra.mxu0 %v86
    %v277 = vpop.f32.mrf.mxu0
    %v278 = vadd.f32 0.0, %v277
    %279 = vmatmul.f32.gmra.mxu0 %v87
    %v280 = vpop.f32.mrf.mxu0
    %v281 = vadd.f32 0.0, %v280
    %282 = vmatmul.f32.gmra.mxu0 %v88
    %v283 = vpop.f32.mrf.mxu0
    %v284 = vadd.f32 0.0, %v283
    %285 = vmatmul.f32.gmra.mxu0 %v89
    %v286 = vpop.f32.mrf.mxu0
    %v287 = vadd.f32 0.0, %v286
    %288 = vmatmul.f32.gmra.mxu0 %v90
    %v289 = vpop.f32.mrf.mxu0
    %v290 = vadd.f32 0.0, %v289
    %291 = vmatmul.f32.gmra.mxu0 %v91
    %v292 = vpop.f32.mrf.mxu0
    %v293 = vadd.f32 0.0, %v292
    %294 = vmatmul.f32.gmra.mxu0 %v92
    %v295 = vpop.f32.mrf.mxu0
    %v296 = vadd.f32 0.0, %v295
    %297 = vmatmul.f32.gmra.mxu0 %v93
    %v298 = vpop.f32.mrf.mxu0
    %v299 = vadd.f32 0.0, %v298
    %300 = vmatmul.f32.gmra.mxu0 %v94
    %v301 = vpop.f32.mrf.mxu0
    %v302 = vadd.f32 0.0, %v301
    %303 = vmatmul.f32.gmra.mxu0 %v95
    %v304 = vpop.f32.mrf.mxu0
    %v305 = vadd.f32 0.0, %v304
    %306 = vdwg.mxu0
    %307 = vmatpush.xpose.msra.mxu0 %v111
    %308 = vmatpush.xpose.msra.mxu0 %v110
    %309 = vmatpush.xpose.msra.mxu0 %v109
    %310 = vmatpush.xpose.msra.mxu0 %v108
    %311 = vmatpush.xpose.msra.mxu0 %v107
    %312 = vmatpush.xpose.msra.mxu0 %v106
    %313 = vmatpush.xpose.msra.mxu0 %v105
    %314 = vmatpush.xpose.msra.mxu0 %v104
    %315 = vmatpush.xpose.msra.mxu0 %v103
    %316 = vmatpush.xpose.msra.mxu0 %v102
    %317 = vmatpush.xpose.msra.mxu0 %v101
    %318 = vmatpush.xpose.msra.mxu0 %v100
    %319 = vmatpush.xpose.msra.mxu0 %v99
    %320 = vmatpush.xpose.msra.mxu0 %v98
    %321 = vmatpush.xpose.msra.mxu0 %v97
    %322 = vmatpush.xpose.msra.mxu0 %v96
    %323 = vmatmul.f32.gmra.mxu0 %v96
    %v324 = vpop.f32.mrf.mxu0
    %v325 = vadd.f32 0.0, %v324
    %326 = vmatmul.f32.gmra.mxu0 %v97
    %v327 = vpop.f32.mrf.mxu0
    %v328 = vadd.f32 0.0, %v327
    %329 = vmatmul.f32.gmra.mxu0 %v98
    %v330 = vpop.f32.mrf.mxu0
    %v331 = vadd.f32 0.0, %v330
    %332 = vmatmul.f32.gmra.mxu0 %v99
    %v333 = vpop.f32.mrf.mxu0
    %v334 = vadd.f32 0.0, %v333
    %335 = vmatmul.f32.gmra.mxu0 %v100
    %v336 = vpop.f32.mrf.mxu0
    %v337 = vadd.f32 0.0, %v336
    %338 = vmatmul.f32.gmra.mxu0 %v101
    %v339 = vpop.f32.mrf.mxu0
    %v340 = vadd.f32 0.0, %v339
    %341 = vmatmul.f32.gmra.mxu0 %v102
    %v342 = vpop.f32.mrf.mxu0
    %v343 = vadd.f32 0.0, %v342
    %344 = vmatmul.f32.gmra.mxu0 %v103
    %v345 = vpop.f32.mrf.mxu0
    %v346 = vadd.f32 0.0, %v345
    %347 = vmatmul.f32.gmra.mxu0 %v104
    %v348 = vpop.f32.mrf.mxu0
    %v349 = vadd.f32 0.0, %v348
    %350 = vmatmul.f32.gmra.mxu0 %v105
    %v351 = vpop.f32.mrf.mxu0
    %v352 = vadd.f32 0.0, %v351
    %353 = vmatmul.f32.gmra.mxu0 %v106
    %v354 = vpop.f32.mrf.mxu0
    %v355 = vadd.f32 0.0, %v354
    %356 = vmatmul.f32.gmra.mxu0 %v107
    %v357 = vpop.f32.mrf.mxu0
    %v358 = vadd.f32 0.0, %v357
    %359 = vmatmul.f32.gmra.mxu0 %v108
    %v360 = vpop.f32.mrf.mxu0
    %v361 = vadd.f32 0.0, %v360
    %362 = vmatmul.f32.gmra.mxu0 %v109
    %v363 = vpop.f32.mrf.mxu0
    %v364 = vadd.f32 0.0, %v363
    %365 = vmatmul.f32.gmra.mxu0 %v110
    %v366 = vpop.f32.mrf.mxu0
    %v367 = vadd.f32 0.0, %v366
    %368 = vmatmul.f32.gmra.mxu0 %v111
    %v369 = vpop.f32.mrf.mxu0
    %v370 = vadd.f32 0.0, %v369
    %371 = vdwg.mxu0
    %372 = vmatpush.xpose.msra.mxu0 %v63
    %373 = vmatpush.xpose.msra.mxu0 %v62
    %374 = vmatpush.xpose.msra.mxu0 %v61
    %375 = vmatpush.xpose.msra.mxu0 %v60
    %376 = vmatpush.xpose.msra.mxu0 %v59
    %377 = vmatpush.xpose.msra.mxu0 %v58
    %378 = vmatpush.xpose.msra.mxu0 %v57
    %379 = vmatpush.xpose.msra.mxu0 %v56
    %380 = vmatpush.xpose.msra.mxu0 %v55
    %381 = vmatpush.xpose.msra.mxu0 %v54
    %382 = vmatpush.xpose.msra.mxu0 %v53
    %383 = vmatpush.xpose.msra.mxu0 %v52
    %384 = vmatpush.xpose.msra.mxu0 %v51
    %385 = vmatpush.xpose.msra.mxu0 %v50
    %386 = vmatpush.xpose.msra.mxu0 %v49
    %387 = vmatpush.xpose.msra.mxu0 %v48
    %388 = vmatmul.f32.gmra.mxu0 %v44
    %v389 = vpop.f32.mrf.mxu0
    %v390 = vadd.f32 0.0, %v389
    %391 = vdwg.mxu0
    %392 = vmatpush.xpose.msra.mxu0 %v79
    %393 = vmatpush.xpose.msra.mxu0 %v78
    %394 = vmatpush.xpose.msra.mxu0 %v77
    %395 = vmatpush.xpose.msra.mxu0 %v76
    %396 = vmatpush.xpose.msra.mxu0 %v75
    %397 = vmatpush.xpose.msra.mxu0 %v74
    %398 = vmatpush.xpose.msra.mxu0 %v73
    %399 = vmatpush.xpose.msra.mxu0 %v72
    %400 = vmatpush.xpose.msra.mxu0 %v71
    %401 = vmatpush.xpose.msra.mxu0 %v70
    %402 = vmatpush.xpose.msra.mxu0 %v69
    %403 = vmatpush.xpose.msra.mxu0 %v68
    %404 = vmatpush.xpose.msra.mxu0 %v67
    %405 = vmatpush.xpose.msra.mxu0 %v66
    %406 = vmatpush.xpose.msra.mxu0 %v65
    %407 = vmatpush.xpose.msra.mxu0 %v64
    %408 = vmatmul.f32.gmra.mxu0 %v45
    %v409 = vpop.f32.mrf.mxu0
    %v410 = vadd.f32 0.0, %v409
    %411 = vdwg.mxu0
    %412 = vmatpush.xpose.msra.mxu0 %v95
    %413 = vmatpush.xpose.msra.mxu0 %v94
    %414 = vmatpush.xpose.msra.mxu0 %v93
    %415 = vmatpush.xpose.msra.mxu0 %v92
    %416 = vmatpush.xpose.msra.mxu0 %v91
    %417 = vmatpush.xpose.msra.mxu0 %v90
    %418 = vmatpush.xpose.msra.mxu0 %v89
    %419 = vmatpush.xpose.msra.mxu0 %v88
    %420 = vmatpush.xpose.msra.mxu0 %v87
    %421 = vmatpush.xpose.msra.mxu0 %v86
    %422 = vmatpush.xpose.msra.mxu0 %v85
    %423 = vmatpush.xpose.msra.mxu0 %v84
    %424 = vmatpush.xpose.msra.mxu0 %v83
    %425 = vmatpush.xpose.msra.mxu0 %v82
    %426 = vmatpush.xpose.msra.mxu0 %v81
    %427 = vmatpush.xpose.msra.mxu0 %v80
    %428 = vmatmul.f32.gmra.mxu0 %v46
    %v429 = vpop.f32.mrf.mxu0
    %v430 = vadd.f32 0.0, %v429
    %431 = vdwg.mxu0
    %432 = vmatpush.xpose.msra.mxu0 %v111
    %433 = vmatpush.xpose.msra.mxu0 %v110
    %434 = vmatpush.xpose.msra.mxu0 %v109
    %435 = vmatpush.xpose.msra.mxu0 %v108
    %436 = vmatpush.xpose.msra.mxu0 %v107
    %437 = vmatpush.xpose.msra.mxu0 %v106
    %438 = vmatpush.xpose.msra.mxu0 %v105
    %439 = vmatpush.xpose.msra.mxu0 %v104
    %440 = vmatpush.xpose.msra.mxu0 %v103
    %441 = vmatpush.xpose.msra.mxu0 %v102
    %442 = vmatpush.xpose.msra.mxu0 %v101
    %443 = vmatpush.xpose.msra.mxu0 %v100
    %444 = vmatpush.xpose.msra.mxu0 %v99
    %445 = vmatpush.xpose.msra.mxu0 %v98
    %446 = vmatpush.xpose.msra.mxu0 %v97
    %447 = vmatpush.xpose.msra.mxu0 %v96
    %448 = vmatmul.f32.gmra.mxu0 %v47
    %v449 = vpop.f32.mrf.mxu0
    %v450 = vadd.f32 0.0, %v449
    %451 = vdwg.mxu0
    %v452 = vlaneseq
    %v453 = vand.u32 %v452, 127
    %vm454 = vcmp.lt.s32.totalorder %v453, 8
    %v455 = vsel %vm454, 1, 0
    %vm456 = vcmp.eq.s32.totalorder %v455, 1
    %v457 = vsel %vm456, %v390, -1e+30
    %v458 = vsel %vm456, %v410, -1e+30
    %v459 = vsel %vm456, %v430, -1e+30
    %v460 = vsel %vm456, %v450, -1e+30
    %vm461 = vcmask 1041408
    %v462 = vsel %vm461, %v457, -inf
    %463 = vmax.xlane.f32.xlu0 %v462
    %v464 = vpop.xlane.xlu0 %463
    %v465 = vsel %vm461, %v458, -inf
    %466 = vmax.xlane.f32.xlu0 %v465
    %v467 = vpop.xlane.xlu0 %466
    %v468 = vsel %vm461, %v459, -inf
    %469 = vmax.xlane.f32.xlu0 %v468
    %v470 = vpop.xlane.xlu0 %469
    %v471 = vsel %vm461, %v460, -inf
    %472 = vmax.xlane.f32.xlu0 %v471
    %v473 = vpop.xlane.xlu0 %472
    %v474 = vsub.f32 %v457, %v464
    %v475 = vsub.f32 %v458, %v467
    %v476 = vsub.f32 %v459, %v470
    %v477 = vsub.f32 %v460, %v473
    %v478 = vmul.f32 %v474, 1.442695
    %v479 = vpow.pop %v478
    %v480 = vmul.f32 %v475, 1.442695
    %v481 = vpow.pop %v480
    %v482 = vmul.f32 %v476, 1.442695
    %v483 = vpow.pop %v482
    %v484 = vmul.f32 %v477, 1.442695
    %v485 = vpow.pop %v484
    %v486 = vsel %vm461, %v479, 0.0
    %487 = vadd.xlane.f32.xlu0 %v486
    %v488 = vpop.xlane.xlu0 %487
    %v489 = vsel %vm461, %v481, 0.0
    %490 = vadd.xlane.f32.xlu0 %v489
    %v491 = vpop.xlane.xlu0 %490
    %v492 = vsel %vm461, %v483, 0.0
    %493 = vadd.xlane.f32.xlu0 %v492
    %v494 = vpop.xlane.xlu0 %493
    %v495 = vsel %vm461, %v485, 0.0
    %496 = vadd.xlane.f32.xlu0 %v495
    %v497 = vpop.xlane.xlu0 %496
    %v498 = vrcp.pop %v488
    %v499 = vmul.f32 %v488, %v498
    %v500 = vsub.f32 1.0, %v499
    %v501 = vmul.f32 %v498, %v500
    %v502 = vadd.f32 %v498, %v501
    %vm503 = vweird.f32 %v488
    %vm504 = vweird.f32 %v498
    %vm505 = vmor %vm503, %vm504
    %v506 = vsel %vm505, %v498, %v502
    %v507 = vand.u32 2147483647, %v488
    %vm508 = vcmp.eq.f32.partialorder %v507, 8.507059e+37
    %v509 = vand.u32 %v488, 2147483648
    %v510 = vor.u32 1.1754944e-38, %v509
    %v511 = vsel %vm508, %v510, %v506
    %v512 = vmul.f32 %v479, %v511
    %v513 = vrcp.pop %v491
    %v514 = vmul.f32 %v491, %v513
    %v515 = vsub.f32 1.0, %v514
    %v516 = vmul.f32 %v513, %v515
    %v517 = vadd.f32 %v513, %v516
    %vm518 = vweird.f32 %v491
    %vm519 = vweird.f32 %v513
    %vm520 = vmor %vm518, %vm519
    %v521 = vsel %vm520, %v513, %v517
    %v522 = vand.u32 2147483647, %v491
    %vm523 = vcmp.eq.f32.partialorder %v522, 8.507059e+37
    %v524 = vand.u32 %v491, 2147483648
    %v525 = vor.u32 1.1754944e-38, %v524
    %v526 = vsel %vm523, %v525, %v521
    %v527 = vmul.f32 %v481, %v526
    %v528 = vrcp.pop %v494
    %v529 = vmul.f32 %v494, %v528
    %v530 = vsub.f32 1.0, %v529
    %v531 = vmul.f32 %v528, %v530
    %v532 = vadd.f32 %v528, %v531
    %vm533 = vweird.f32 %v494
    %vm534 = vweird.f32 %v528
    %vm535 = vmor %vm533, %vm534
    %v536 = vsel %vm535, %v528, %v532
    %v537 = vand.u32 2147483647, %v494
    %vm538 = vcmp.eq.f32.partialorder %v537, 8.507059e+37
    %v539 = vand.u32 %v494, 2147483648
    %v540 = vor.u32 1.1754944e-38, %v539
    %v541 = vsel %vm538, %v540, %v536
    %v542 = vmul.f32 %v483, %v541
    %v543 = vrcp.pop %v497
    %v544 = vmul.f32 %v497, %v543
    %v545 = vsub.f32 1.0, %v544
    %v546 = vmul.f32 %v543, %v545
    %v547 = vadd.f32 %v543, %v546
    %vm548 = vweird.f32 %v497
    %vm549 = vweird.f32 %v543
    %vm550 = vmor %vm548, %vm549
    %v551 = vsel %vm550, %v543, %v547
    %v552 = vand.u32 2147483647, %v497
    %vm553 = vcmp.eq.f32.partialorder %v552, 8.507059e+37
    %v554 = vand.u32 %v497, 2147483648
    %v555 = vor.u32 1.1754944e-38, %v554
    %v556 = vsel %vm553, %v555, %v551
    %v557 = vmul.f32 %v485, %v556
    %558 = vmatpush.msra.mxu0 %v175
    %559 = vmatpush.msra.mxu0 %v172
    %560 = vmatpush.msra.mxu0 %v169
    %561 = vmatpush.msra.mxu0 %v166
    %562 = vmatpush.msra.mxu0 %v163
    %563 = vmatpush.msra.mxu0 %v160
    %564 = vmatpush.msra.mxu0 %v157
    %565 = vmatpush.msra.mxu0 %v154
    %566 = vmatpush.msra.mxu0 %v151
    %567 = vmatpush.msra.mxu0 %v148
    %568 = vmatpush.msra.mxu0 %v145
    %569 = vmatpush.msra.mxu0 %v142
    %570 = vmatpush.msra.mxu0 %v139
    %571 = vmatpush.msra.mxu0 %v136
    %572 = vmatpush.msra.mxu0 %v133
    %573 = vmatpush.msra.mxu0 %v130
    %574 = vmatmul.f32.gmra.mxu0 %v512
    %v575 = vpop.f32.mrf.mxu0
    %v576 = vadd.f32 0.0, %v575
    %577 = vdwg.mxu0
    %578 = vmatpush.msra.mxu0 %v240
    %579 = vmatpush.msra.mxu0 %v237
    %580 = vmatpush.msra.mxu0 %v234
    %581 = vmatpush.msra.mxu0 %v231
    %582 = vmatpush.msra.mxu0 %v228
    %583 = vmatpush.msra.mxu0 %v225
    %584 = vmatpush.msra.mxu0 %v222
    %585 = vmatpush.msra.mxu0 %v219
    %586 = vmatpush.msra.mxu0 %v216
    %587 = vmatpush.msra.mxu0 %v213
    %588 = vmatpush.msra.mxu0 %v210
    %589 = vmatpush.msra.mxu0 %v207
    %590 = vmatpush.msra.mxu0 %v204
    %591 = vmatpush.msra.mxu0 %v201
    %592 = vmatpush.msra.mxu0 %v198
    %593 = vmatpush.msra.mxu0 %v195
    %594 = vmatmul.f32.gmra.mxu0 %v527
    %v595 = vpop.f32.mrf.mxu0
    %v596 = vadd.f32 0.0, %v595
    %597 = vdwg.mxu0
    %598 = vmatpush.msra.mxu0 %v305
    %599 = vmatpush.msra.mxu0 %v302
    %600 = vmatpush.msra.mxu0 %v299
    %601 = vmatpush.msra.mxu0 %v296
    %602 = vmatpush.msra.mxu0 %v293
    %603 = vmatpush.msra.mxu0 %v290
    %604 = vmatpush.msra.mxu0 %v287
    %605 = vmatpush.msra.mxu0 %v284
    %606 = vmatpush.msra.mxu0 %v281
    %607 = vmatpush.msra.mxu0 %v278
    %608 = vmatpush.msra.mxu0 %v275
    %609 = vmatpush.msra.mxu0 %v272
    %610 = vmatpush.msra.mxu0 %v269
    %611 = vmatpush.msra.mxu0 %v266
    %612 = vmatpush.msra.mxu0 %v263
    %613 = vmatpush.msra.mxu0 %v260
    %614 = vmatmul.f32.gmra.mxu0 %v542
    %v615 = vpop.f32.mrf.mxu0
    %v616 = vadd.f32 0.0, %v615
    %617 = vdwg.mxu0
    %618 = vmatpush.msra.mxu0 %v370
    %619 = vmatpush.msra.mxu0 %v367
    %620 = vmatpush.msra.mxu0 %v364
    %621 = vmatpush.msra.mxu0 %v361
    %622 = vmatpush.msra.mxu0 %v358
    %623 = vmatpush.msra.mxu0 %v355
    %624 = vmatpush.msra.mxu0 %v352
    %625 = vmatpush.msra.mxu0 %v349
    %626 = vmatpush.msra.mxu0 %v346
    %627 = vmatpush.msra.mxu0 %v343
    %628 = vmatpush.msra.mxu0 %v340
    %629 = vmatpush.msra.mxu0 %v337
    %630 = vmatpush.msra.mxu0 %v334
    %631 = vmatpush.msra.mxu0 %v331
    %632 = vmatpush.msra.mxu0 %v328
    %633 = vmatpush.msra.mxu0 %v325
    %634 = vmatmul.f32.gmra.mxu0 %v557
    %v635 = vpop.f32.mrf.mxu0
    %v636 = vadd.f32 0.0, %v635
    %637 = vdwg.mxu0
    %v638 = vsel %vm456, %v576, -1e+30
    %v639 = vsel %vm456, %v596, -1e+30
    %v640 = vsel %vm456, %v616, -1e+30
    %v641 = vsel %vm456, %v636, -1e+30
    %v642 = vsel %vm461, %v638, -inf
    %643 = vmax.xlane.f32.xlu0 %v642
    %v644 = vpop.xlane.xlu0 %643
    %v645 = vsel %vm461, %v639, -inf
    %646 = vmax.xlane.f32.xlu0 %v645
    %v647 = vpop.xlane.xlu0 %646
    %v648 = vsel %vm461, %v640, -inf
    %649 = vmax.xlane.f32.xlu0 %v648
    %v650 = vpop.xlane.xlu0 %649
    %v651 = vsel %vm461, %v641, -inf
    %652 = vmax.xlane.f32.xlu0 %v651
    %v653 = vpop.xlane.xlu0 %652
    %v654 = vsub.f32 %v638, %v644
    %v655 = vsub.f32 %v639, %v647
    %v656 = vsub.f32 %v640, %v650
    %v657 = vsub.f32 %v641, %v653
    %v658 = vmul.f32 %v654, 1.442695
    %v659 = vpow.pop %v658
    %v660 = vmul.f32 %v655, 1.442695
    %v661 = vpow.pop %v660
    %v662 = vmul.f32 %v656, 1.442695
    %v663 = vpow.pop %v662
    %v664 = vmul.f32 %v657, 1.442695
    %v665 = vpow.pop %v664
    %v666 = vsel %vm461, %v659, 0.0
    %667 = vadd.xlane.f32.xlu0 %v666
    %v668 = vpop.xlane.xlu0 %667
    %v669 = vsel %vm461, %v661, 0.0
    %670 = vadd.xlane.f32.xlu0 %v669
    %v671 = vpop.xlane.xlu0 %670
    %v672 = vsel %vm461, %v663, 0.0
    %673 = vadd.xlane.f32.xlu0 %v672
    %v674 = vpop.xlane.xlu0 %673
    %v675 = vsel %vm461, %v665, 0.0
    %676 = vadd.xlane.f32.xlu0 %v675
    %v677 = vpop.xlane.xlu0 %676
    %v678 = vrcp.pop %v668
    %v679 = vmul.f32 %v668, %v678
    %v680 = vsub.f32 1.0, %v679
    %v681 = vmul.f32 %v678, %v680
    %v682 = vadd.f32 %v678, %v681
    %vm683 = vweird.f32 %v668
    %vm684 = vweird.f32 %v678
    %vm685 = vmor %vm683, %vm684
    %v686 = vsel %vm685, %v678, %v682
    %v687 = vand.u32 2147483647, %v668
    %vm688 = vcmp.eq.f32.partialorder %v687, 8.507059e+37
    %v689 = vand.u32 %v668, 2147483648
    %v690 = vor.u32 1.1754944e-38, %v689
    %v691 = vsel %vm688, %v690, %v686
    %v692 = vmul.f32 %v659, %v691
    %v693 = vrcp.pop %v671
    %v694 = vmul.f32 %v671, %v693
    %v695 = vsub.f32 1.0, %v694
    %v696 = vmul.f32 %v693, %v695
    %v697 = vadd.f32 %v693, %v696
    %vm698 = vweird.f32 %v671
    %vm699 = vweird.f32 %v693
    %vm700 = vmor %vm698, %vm699
    %v701 = vsel %vm700, %v693, %v697
    %v702 = vand.u32 2147483647, %v671
    %vm703 = vcmp.eq.f32.partialorder %v702, 8.507059e+37
    %v704 = vand.u32 %v671, 2147483648
    %v705 = vor.u32 1.1754944e-38, %v704
    %v706 = vsel %vm703, %v705, %v701
    %v707 = vmul.f32 %v661, %v706
    %v708 = vrcp.pop %v674
    %v709 = vmul.f32 %v674, %v708
    %v710 = vsub.f32 1.0, %v709
    %v711 = vmul.f32 %v708, %v710
    %v712 = vadd.f32 %v708, %v711
    %vm713 = vweird.f32 %v674
    %vm714 = vweird.f32 %v708
    %vm715 = vmor %vm713, %vm714
    %v716 = vsel %vm715, %v708, %v712
    %v717 = vand.u32 2147483647, %v674
    %vm718 = vcmp.eq.f32.partialorder %v717, 8.507059e+37
    %v719 = vand.u32 %v674, 2147483648
    %v720 = vor.u32 1.1754944e-38, %v719
    %v721 = vsel %vm718, %v720, %v716
    %v722 = vmul.f32 %v663, %v721
    %v723 = vrcp.pop %v677
    %v724 = vmul.f32 %v677, %v723
    %v725 = vsub.f32 1.0, %v724
    %v726 = vmul.f32 %v723, %v725
    %v727 = vadd.f32 %v723, %v726
    %vm728 = vweird.f32 %v677
    %vm729 = vweird.f32 %v723
    %vm730 = vmor %vm728, %vm729
    %v731 = vsel %vm730, %v723, %v727
    %v732 = vand.u32 2147483647, %v677
    %vm733 = vcmp.eq.f32.partialorder %v732, 8.507059e+37
    %v734 = vand.u32 %v677, 2147483648
    %v735 = vor.u32 1.1754944e-38, %v734
    %v736 = vsel %vm733, %v735, %v731
    %v737 = vmul.f32 %v665, %v736
    %738 = vmatpush.msra.mxu0 %v175
    %739 = vmatpush.msra.mxu0 %v172
    %740 = vmatpush.msra.mxu0 %v169
    %741 = vmatpush.msra.mxu0 %v166
    %742 = vmatpush.msra.mxu0 %v163
    %743 = vmatpush.msra.mxu0 %v160
    %744 = vmatpush.msra.mxu0 %v157
    %745 = vmatpush.msra.mxu0 %v154
    %746 = vmatpush.msra.mxu0 %v151
    %747 = vmatpush.msra.mxu0 %v148
    %748 = vmatpush.msra.mxu0 %v145
    %749 = vmatpush.msra.mxu0 %v142
    %750 = vmatpush.msra.mxu0 %v139
    %751 = vmatpush.msra.mxu0 %v136
    %752 = vmatpush.msra.mxu0 %v133
    %753 = vmatpush.msra.mxu0 %v130
    %754 = vmatmul.f32.gmra.mxu0 %v692
    %v755 = vpop.f32.mrf.mxu0
    %v756 = vadd.f32 0.0, %v755
    %757 = vdwg.mxu0
    %758 = vmatpush.msra.mxu0 %v240
    %759 = vmatpush.msra.mxu0 %v237
    %760 = vmatpush.msra.mxu0 %v234
    %761 = vmatpush.msra.mxu0 %v231
    %762 = vmatpush.msra.mxu0 %v228
    %763 = vmatpush.msra.mxu0 %v225
    %764 = vmatpush.msra.mxu0 %v222
    %765 = vmatpush.msra.mxu0 %v219
    %766 = vmatpush.msra.mxu0 %v216
    %767 = vmatpush.msra.mxu0 %v213
    %768 = vmatpush.msra.mxu0 %v210
    %769 = vmatpush.msra.mxu0 %v207
    %770 = vmatpush.msra.mxu0 %v204
    %771 = vmatpush.msra.mxu0 %v201
    %772 = vmatpush.msra.mxu0 %v198
    %773 = vmatpush.msra.mxu0 %v195
    %774 = vmatmul.f32.gmra.mxu0 %v707
    %v775 = vpop.f32.mrf.mxu0
    %v776 = vadd.f32 0.0, %v775
    %777 = vdwg.mxu0
    %778 = vmatpush.msra.mxu0 %v305
    %779 = vmatpush.msra.mxu0 %v302
    %780 = vmatpush.msra.mxu0 %v299
    %781 = vmatpush.msra.mxu0 %v296
    %782 = vmatpush.msra.mxu0 %v293
    %783 = vmatpush.msra.mxu0 %v290
    %784 = vmatpush.msra.mxu0 %v287
    %785 = vmatpush.msra.mxu0 %v284
    %786 = vmatpush.msra.mxu0 %v281
    %787 = vmatpush.msra.mxu0 %v278
    %788 = vmatpush.msra.mxu0 %v275
    %789 = vmatpush.msra.mxu0 %v272
    %790 = vmatpush.msra.mxu0 %v269
    %791 = vmatpush.msra.mxu0 %v266
    %792 = vmatpush.msra.mxu0 %v263
    %793 = vmatpush.msra.mxu0 %v260
    %794 = vmatmul.f32.gmra.mxu0 %v722
    %v795 = vpop.f32.mrf.mxu0
    %v796 = vadd.f32 0.0, %v795
    %797 = vdwg.mxu0
    %798 = vmatpush.msra.mxu0 %v370
    %799 = vmatpush.msra.mxu0 %v367
    %800 = vmatpush.msra.mxu0 %v364
    %801 = vmatpush.msra.mxu0 %v361
    %802 = vmatpush.msra.mxu0 %v358
    %803 = vmatpush.msra.mxu0 %v355
    %804 = vmatpush.msra.mxu0 %v352
    %805 = vmatpush.msra.mxu0 %v349
    %806 = vmatpush.msra.mxu0 %v346
    %807 = vmatpush.msra.mxu0 %v343
    %808 = vmatpush.msra.mxu0 %v340
    %809 = vmatpush.msra.mxu0 %v337
    %810 = vmatpush.msra.mxu0 %v334
    %811 = vmatpush.msra.mxu0 %v331
    %812 = vmatpush.msra.mxu0 %v328
    %813 = vmatpush.msra.mxu0 %v325
    %814 = vmatmul.f32.gmra.mxu0 %v737
    %v815 = vpop.f32.mrf.mxu0
    %v816 = vadd.f32 0.0, %v815
    %817 = vdwg.mxu0
    %v818 = vsel %vm456, %v756, -1e+30
    %v819 = vsel %vm456, %v776, -1e+30
    %v820 = vsel %vm456, %v796, -1e+30
    %v821 = vsel %vm456, %v816, -1e+30
    %v822 = vsel %vm461, %v818, -inf
    %823 = vmax.xlane.f32.xlu0 %v822
    %v824 = vpop.xlane.xlu0 %823
    %v825 = vsel %vm461, %v819, -inf
    %826 = vmax.xlane.f32.xlu0 %v825
    %v827 = vpop.xlane.xlu0 %826
    %v828 = vsel %vm461, %v820, -inf
    %829 = vmax.xlane.f32.xlu0 %v828
    %v830 = vpop.xlane.xlu0 %829
    %v831 = vsel %vm461, %v821, -inf
    %832 = vmax.xlane.f32.xlu0 %v831
    %v833 = vpop.xlane.xlu0 %832
    %v834 = vsub.f32 %v818, %v824
    %v835 = vsub.f32 %v819, %v827
    %v836 = vsub.f32 %v820, %v830
    %v837 = vsub.f32 %v821, %v833
    %v838 = vmul.f32 %v834, 1.442695
    %v839 = vpow.pop %v838
    %v840 = vmul.f32 %v835, 1.442695
    %v841 = vpow.pop %v840
    %v842 = vmul.f32 %v836, 1.442695
    %v843 = vpow.pop %v842
    %v844 = vmul.f32 %v837, 1.442695
    %v845 = vpow.pop %v844
    %v846 = vsel %vm461, %v839, 0.0
    %847 = vadd.xlane.f32.xlu0 %v846
    %v848 = vpop.xlane.xlu0 %847
    %v849 = vsel %vm461, %v841, 0.0
    %850 = vadd.xlane.f32.xlu0 %v849
    %v851 = vpop.xlane.xlu0 %850
    %v852 = vsel %vm461, %v843, 0.0
    %853 = vadd.xlane.f32.xlu0 %v852
    %v854 = vpop.xlane.xlu0 %853
    %v855 = vsel %vm461, %v845, 0.0
    %856 = vadd.xlane.f32.xlu0 %v855
    %v857 = vpop.xlane.xlu0 %856
    %v858 = vrcp.pop %v848
    %v859 = vmul.f32 %v848, %v858
    %v860 = vsub.f32 1.0, %v859
    %v861 = vmul.f32 %v858, %v860
    %v862 = vadd.f32 %v858, %v861
    %vm863 = vweird.f32 %v848
    %vm864 = vweird.f32 %v858
    %vm865 = vmor %vm863, %vm864
    %v866 = vsel %vm865, %v858, %v862
    %v867 = vand.u32 2147483647, %v848
    %vm868 = vcmp.eq.f32.partialorder %v867, 8.507059e+37
    %v869 = vand.u32 %v848, 2147483648
    %v870 = vor.u32 1.1754944e-38, %v869
    %v871 = vsel %vm868, %v870, %v866
    %v872 = vmul.f32 %v839, %v871
    %v873 = vrcp.pop %v851
    %v874 = vmul.f32 %v851, %v873
    %v875 = vsub.f32 1.0, %v874
    %v876 = vmul.f32 %v873, %v875
    %v877 = vadd.f32 %v873, %v876
    %vm878 = vweird.f32 %v851
    %vm879 = vweird.f32 %v873
    %vm880 = vmor %vm878, %vm879
    %v881 = vsel %vm880, %v873, %v877
    %v882 = vand.u32 2147483647, %v851
    %vm883 = vcmp.eq.f32.partialorder %v882, 8.507059e+37
    %v884 = vand.u32 %v851, 2147483648
    %v885 = vor.u32 1.1754944e-38, %v884
    %v886 = vsel %vm883, %v885, %v881
    %v887 = vmul.f32 %v841, %v886
    %v888 = vrcp.pop %v854
    %v889 = vmul.f32 %v854, %v888
    %v890 = vsub.f32 1.0, %v889
    %v891 = vmul.f32 %v888, %v890
    %v892 = vadd.f32 %v888, %v891
    %vm893 = vweird.f32 %v854
    %vm894 = vweird.f32 %v888
    %vm895 = vmor %vm893, %vm894
    %v896 = vsel %vm895, %v888, %v892
    %v897 = vand.u32 2147483647, %v854
    %vm898 = vcmp.eq.f32.partialorder %v897, 8.507059e+37
    %v899 = vand.u32 %v854, 2147483648
    %v900 = vor.u32 1.1754944e-38, %v899
    %v901 = vsel %vm898, %v900, %v896
    %v902 = vmul.f32 %v843, %v901
    %v903 = vrcp.pop %v857
    %v904 = vmul.f32 %v857, %v903
    %v905 = vsub.f32 1.0, %v904
    %v906 = vmul.f32 %v903, %v905
    %v907 = vadd.f32 %v903, %v906
    %vm908 = vweird.f32 %v857
    %vm909 = vweird.f32 %v903
    %vm910 = vmor %vm908, %vm909
    %v911 = vsel %vm910, %v903, %v907
    %v912 = vand.u32 2147483647, %v857
    %vm913 = vcmp.eq.f32.partialorder %v912, 8.507059e+37
    %v914 = vand.u32 %v857, 2147483648
    %v915 = vor.u32 1.1754944e-38, %v914
    %v916 = vsel %vm913, %v915, %v911
    %v917 = vmul.f32 %v845, %v916
    %918 = vmatpush.msra.mxu0 %v175
    %919 = vmatpush.msra.mxu0 %v172
    %920 = vmatpush.msra.mxu0 %v169
    %921 = vmatpush.msra.mxu0 %v166
    %922 = vmatpush.msra.mxu0 %v163
    %923 = vmatpush.msra.mxu0 %v160
    %924 = vmatpush.msra.mxu0 %v157
    %925 = vmatpush.msra.mxu0 %v154
    %926 = vmatpush.msra.mxu0 %v151
    %927 = vmatpush.msra.mxu0 %v148
    %928 = vmatpush.msra.mxu0 %v145
    %929 = vmatpush.msra.mxu0 %v142
    %930 = vmatpush.msra.mxu0 %v139
    %931 = vmatpush.msra.mxu0 %v136
    %932 = vmatpush.msra.mxu0 %v133
    %933 = vmatpush.msra.mxu0 %v130
    %934 = vmatmul.f32.gmra.mxu0 %v872
    %v935 = vpop.f32.mrf.mxu0
    %v936 = vadd.f32 0.0, %v935
    %937 = vdwg.mxu0
    %938 = vmatpush.msra.mxu0 %v240
    %939 = vmatpush.msra.mxu0 %v237
    %940 = vmatpush.msra.mxu0 %v234
    %941 = vmatpush.msra.mxu0 %v231
    %942 = vmatpush.msra.mxu0 %v228
    %943 = vmatpush.msra.mxu0 %v225
    %944 = vmatpush.msra.mxu0 %v222
    %945 = vmatpush.msra.mxu0 %v219
    %946 = vmatpush.msra.mxu0 %v216
    %947 = vmatpush.msra.mxu0 %v213
    %948 = vmatpush.msra.mxu0 %v210
    %949 = vmatpush.msra.mxu0 %v207
    %950 = vmatpush.msra.mxu0 %v204
    %951 = vmatpush.msra.mxu0 %v201
    %952 = vmatpush.msra.mxu0 %v198
    %953 = vmatpush.msra.mxu0 %v195
    %954 = vmatmul.f32.gmra.mxu0 %v887
    %v955 = vpop.f32.mrf.mxu0
    %v956 = vadd.f32 0.0, %v955
    %957 = vdwg.mxu0
    %958 = vmatpush.msra.mxu0 %v305
    %959 = vmatpush.msra.mxu0 %v302
    %960 = vmatpush.msra.mxu0 %v299
    %961 = vmatpush.msra.mxu0 %v296
    %962 = vmatpush.msra.mxu0 %v293
    %963 = vmatpush.msra.mxu0 %v290
    %964 = vmatpush.msra.mxu0 %v287
    %965 = vmatpush.msra.mxu0 %v284
    %966 = vmatpush.msra.mxu0 %v281
    %967 = vmatpush.msra.mxu0 %v278
    %968 = vmatpush.msra.mxu0 %v275
    %969 = vmatpush.msra.mxu0 %v272
    %970 = vmatpush.msra.mxu0 %v269
    %971 = vmatpush.msra.mxu0 %v266
    %972 = vmatpush.msra.mxu0 %v263
    %973 = vmatpush.msra.mxu0 %v260
    %974 = vmatmul.f32.gmra.mxu0 %v902
    %v975 = vpop.f32.mrf.mxu0
    %v976 = vadd.f32 0.0, %v975
    %977 = vdwg.mxu0
    %978 = vmatpush.msra.mxu0 %v370
    %979 = vmatpush.msra.mxu0 %v367
    %980 = vmatpush.msra.mxu0 %v364
    %981 = vmatpush.msra.mxu0 %v361
    %982 = vmatpush.msra.mxu0 %v358
    %983 = vmatpush.msra.mxu0 %v355
    %984 = vmatpush.msra.mxu0 %v352
    %985 = vmatpush.msra.mxu0 %v349
    %986 = vmatpush.msra.mxu0 %v346
    %987 = vmatpush.msra.mxu0 %v343
    %988 = vmatpush.msra.mxu0 %v340
    %989 = vmatpush.msra.mxu0 %v337
    %990 = vmatpush.msra.mxu0 %v334
    %991 = vmatpush.msra.mxu0 %v331
    %992 = vmatpush.msra.mxu0 %v328
    %993 = vmatpush.msra.mxu0 %v325
    %994 = vmatmul.f32.gmra.mxu0 %v917
    %v995 = vpop.f32.mrf.mxu0
    %v996 = vadd.f32 0.0, %v995
    %997 = vdwg.mxu0
    %998 = vst [vmem:[#allocation7] sm:$0x3] %v936
    %999 = vst [vmem:[#allocation7 + $0x2] sm:$0x3] %v956
    %1000 = vst [vmem:[#allocation7 + $0x4] sm:$0x3] %v976
    %1001 = vst [vmem:[#allocation7 + $0x6] sm:$0x3] %v996
    // Predicated region
    $region18: #{tpu_custom_call.1} parent=1 // pred_check
      _
    $region19: #{tpu_custom_call.1} parent=1 // pred_check_branch
      %1003 = sbr.rel (0) target = $region21
    $region20: #{tpu_custom_call.1} parent=1 // pred_region
      %1005 = vsyncadd [#allocation4], 0
      %s1006 = sshll.u32 [#allocation7], 4
      %s1007 = int_to_ptr.vmem [resolvable:$true] %s1006
      %s1008 = sshll.u32 %s2, 4
      %s1009 = int_to_ptr.hbm [resolvable:$true] %s1008
      %1014 = dma.vmem_to_hbm [thread:$0]  %s1007, 128, %s1009, [#allocation4], 32, 32, 2
    $region21: #{tpu_custom_call.1} parent=1 // pred_fallthru
      _
    // Predicated region
    $region22: #{tpu_custom_call.1} parent=1 // pred_check
      _
    $region23: #{tpu_custom_call.1} parent=1 // pred_check_branch
      %1016 = sbr.rel (0) target = $region25
    $region24: #{tpu_custom_call.1} parent=1 // pred_region
      %1018 = dma.done [#allocation4], 128
    $region25: #{tpu_custom_call.1} parent=1 // pred_fallthru
      _
    %1019 = vsyncpa [#allocation3], 1
    %1020 = vsyncpa [#allocation6], 1
    %1021 = vsyncpa [#allocation4], 1

</llo_original>
